<compile_context>
chip_gen: v6e
topology: v6e:2x2x1
jax: 0.10.0
libtpu: 0.0.40
codegen_flags: <defaults>
</compile_context>

<pallas_src>
import math

import jax
import jax.numpy as jnp
from jax import lax
from jax.experimental import pallas as pl
from jax.experimental.pallas import tpu as pltpu

STANDARDIZED_OB_CLAMPS = (-5.0, 5.0)
LN_EPS = 1e-5  # torch.nn.LayerNorm default


# ----------------------------------------------------------------------------
# Parameter initialization (deterministic, mirrors the PyTorch module's init)
# ----------------------------------------------------------------------------
def orthogonal(key, out_dim, in_dim, gain):
    """Orthogonal init like nn.init.orthogonal_ (returned as (out_dim, in_dim), bf16)."""
    a = jax.random.normal(key, (max(out_dim, in_dim), min(out_dim, in_dim)),
                          dtype=jnp.float32)
    q, r = jnp.linalg.qr(a)
    q = q * jnp.sign(jnp.diagonal(r))
    if out_dim < in_dim:
        w = q.T  # (out_dim, in_dim)
    else:
        w = q    # (out_dim, in_dim)
    w = gain * w[:out_dim, :in_dim]
    # bf16 storage: matmul operands are bf16 on the MXU (f32 accumulate).
    return w.astype(jnp.bfloat16)  # (out_dim, in_dim)  -- PyTorch-native layout


def make_actor_params(key, ob_dim, hidden_dims, ac_dim):
    k1, k2, k3 = jax.random.split(key, 3)
    return {
        # fc_block_1: Linear(ob_dim, h0) + LayerNorm(h0)
        "w1": orthogonal(k1, hidden_dims[0], ob_dim, math.sqrt(2.0)),
        "b1": jnp.zeros((1, hidden_dims[0]), jnp.float32),
        "g1": jnp.ones((1, hidden_dims[0]), jnp.float32),
        "beta1": jnp.zeros((1, hidden_dims[0]), jnp.float32),
        # fc_block_2: Linear(h0, h1) + LayerNorm(h1)
        "w2": orthogonal(k2, hidden_dims[1], hidden_dims[0], math.sqrt(2.0)),
        "b2": jnp.zeros((1, hidden_dims[1]), jnp.float32),
        "g2": jnp.ones((1, hidden_dims[1]), jnp.float32),
        "beta2": jnp.zeros((1, hidden_dims[1]), jnp.float32),
        # head: Linear(h1, ac_dim), gain 0.01
        "w3": orthogonal(k3, ac_dim, hidden_dims[1], 0.01),
        "b3": jnp.zeros((1, ac_dim), jnp.float32),
    }


# ----------------------------------------------------------------------------
# Shared LayerNorm helper (kernel uses axis=0, reference uses axis=-1)
# ----------------------------------------------------------------------------
def _layer_norm(x, gamma, beta, axis):
    mu = jnp.mean(x, axis=axis, keepdims=True)
    var = jnp.mean(jnp.square(x - mu), axis=axis, keepdims=True)
    return (x - mu) * lax.rsqrt(var + LN_EPS) * gamma + beta


# ----------------------------------------------------------------------------
# Pallas kernel: fused standardize (FMA) -> clamp -> (fc + LN + relu) x2
#                -> head -> max_ac * tanh       (batch on the lane axis)
# ----------------------------------------------------------------------------
def make_actor_kernel(max_ac, ob_dim, h0, h1, ac_dim):
    def actor_kernel(ob_ref, vec_ref, w1_ref, w2_ref, w3_ref, out_ref):
        # Packed parameter columns (d_max, 9); VMEM-resident across grid steps.
        vec = vec_ref[...]
        inv_std = vec[:ob_dim, 0:1]
        shift = vec[:ob_dim, 1:2]
        b1, g1, be1 = vec[:h0, 2:3], vec[:h0, 3:4], vec[:h0, 4:5]
        b2, g2, be2 = vec[:h1, 5:6], vec[:h1, 6:7], vec[:h1, 7:8]
        b3 = vec[:ac_dim, 8:9]

        # --- rms_obs.standardize(ob).clamp(-5, 5), divide folded to FMA ---
        x = ob_ref[...] * inv_std + shift                       # (ob_dim, TB)
        x = jnp.clip(x, STANDARDIZED_OB_CLAMPS[0], STANDARDIZED_OB_CLAMPS[1])

        # --- fc_block_1: Linear (bf16 operands, f32 acc) -> LayerNorm -> ReLU ---
        h = jnp.dot(w1_ref[...], x.astype(jnp.bfloat16),
                    preferred_element_type=jnp.float32) + b1    # (h0, TB)
        h = _layer_norm(h, g1, be1, axis=0)
        h = jnp.maximum(h, 0.0)

        # --- fc_block_2 ---
        h = jnp.dot(w2_ref[...], h.astype(jnp.bfloat16),
                    preferred_element_type=jnp.float32) + b2    # (h1, TB)
        h = _layer_norm(h, g2, be2, axis=0)
        h = jnp.maximum(h, 0.0)

        # --- head: Linear -> max_ac * tanh ---
        z = jnp.dot(w3_ref[...], h.astype(jnp.bfloat16),
                    preferred_element_type=jnp.float32) + b3    # (ac_dim, TB)
        out_ref[...] = (max_ac * jnp.tanh(z)).astype(out_ref.dtype)

    return actor_kernel


def actor_forward(ob, rms_mean, rms_std, params, max_ac, *, block_b=4096):
    ob = ob.astype(jnp.float32)
    B, ob_dim = ob.shape
    h0 = params["w1"].shape[0]
    h1 = params["w2"].shape[0]
    ac_dim = params["w3"].shape[0]

    # Fold standardization into a multiply-add (computed once per call).
    inv_std = (1.0 / rms_std).astype(jnp.float32).reshape(ob_dim, 1)
    shift = (-rms_mean.reshape(ob_dim, 1) * inv_std).astype(jnp.float32)

    # Pack all small vectors as COLUMNS into one (d_max, 9) f32 slab -> one DMA;
    # columns broadcast cleanly against (d, TB) activations in the kernel.
    d_max = max(ob_dim, h0, h1, ac_dim)

    def _col(v, d):
        v = v.reshape(d, 1).astype(jnp.float32)
        return jnp.pad(v, ((0, d_max - d), (0, 0)))

    vec_slab = jnp.concatenate(
        [_col(inv_std, ob_dim), _col(shift, ob_dim),
         _col(params["b1"], h0), _col(params["g1"], h0), _col(params["beta1"], h0),
         _col(params["b2"], h1), _col(params["g2"], h1), _col(params["beta2"], h1),
         _col(params["b3"], ac_dim)],
        axis=1)  # (d_max, 9)

    # Batch tiling: TB a multiple of 128 (lane width) so obs loads and the
    # (ac_dim, TB) output stores are fully lane-dense / unmasked.
    b_ceil = pl.cdiv(B, 128) * 128
    tb = min(block_b, b_ceil)
    tb = max(128, (tb // 128) * 128)
    nb = pl.cdiv(b_ceil, tb)
    # Megacore (v7x): keep >= 2 grid steps whenever the batch spans > 1 tile-row.
    if nb == 1 and b_ceil > 128:
        tb = max(128, pl.cdiv(pl.cdiv(b_ceil, 2), 128) * 128)
        nb = pl.cdiv(b_ceil, tb)
    b_pad = nb * tb

    # Transposed, padded obs: (ob_dim, b_pad).  Wrapper-side transpose is
    # layout plumbing so the kernel's elementwise work is lane-dense.
    ob_t = ob.T
    if b_pad != B:
        ob_t = jnp.pad(ob_t, ((0, 0), (0, b_pad - B)))

    w1 = params["w1"].astype(jnp.bfloat16)   # (h0, ob_dim)
    w2 = params["w2"].astype(jnp.bfloat16)   # (h1, h0)
    w3 = params["w3"].astype(jnp.bfloat16)   # (ac_dim, h1)

    cost = pl.CostEstimate(
        flops=2 * b_pad * (ob_dim * h0 + h0 * h1 + h1 * ac_dim),
        transcendentals=b_pad * (ac_dim + 2),  # tanh + 2 rsqrt per sample
        bytes_accessed=(ob_t.size + b_pad * ac_dim + vec_slab.size) * 4
                       + (w1.size + w2.size + w3.size) * 2,
    )

    # Scoped VMEM: per-step footprint is tiny (<2 MiB at tb=8192); only raise
    # the limit if a huge tile would ever approach the v5e 16 MiB default.
    vmem_est = 2 * tb * (ob_dim + ac_dim) * 4 + 4 * tb * max(h0, h1) * 4
    cp_kwargs = dict(dimension_semantics=("parallel",))
    if vmem_est > (12 << 20):
        cp_kwargs["vmem_limit_bytes"] = min(int(vmem_est * 2), 100 << 20)

    out_t = pl.pallas_call(
        make_actor_kernel(float(max_ac), ob_dim, h0, h1, ac_dim),
        out_shape=jax.ShapeDtypeStruct((ac_dim, b_pad), jnp.float32),
        grid=(nb,),
        in_specs=[
            pl.BlockSpec((ob_dim, tb), lambda i: (0, i)),       # obs: tiled over batch (lanes)
            pl.BlockSpec(vec_slab.shape, lambda i: (0, 0)),     # packed vectors: resident
            pl.BlockSpec(w1.shape, lambda i: (0, 0)),           # weights: resident
            pl.BlockSpec(w2.shape, lambda i: (0, 0)),
            pl.BlockSpec(w3.shape, lambda i: (0, 0)),
        ],
        out_specs=pl.BlockSpec((ac_dim, tb), lambda i: (0, i)), # lane-dense stores
        compiler_params=pltpu.CompilerParams(**cp_kwargs),
        cost_estimate=cost,
    )(ob_t, vec_slab, w1, w2, w3)

    return out_t[:, :B].T  # (B, ac_dim), padded columns dropped


# ----------------------------------------------------------------------------
# Pure-JAX reference (same bf16-operand / f32-accumulate semantics)
# ----------------------------------------------------------------------------
def actor_forward_ref(ob, rms_mean, rms_std, params, max_ac):
    x = jnp.clip((ob - rms_mean) / rms_std, *STANDARDIZED_OB_CLAMPS)
    h = jnp.dot(x.astype(jnp.bfloat16), params["w1"].T,
                preferred_element_type=jnp.float32) + params["b1"]
    h = _layer_norm(h, params["g1"], params["beta1"], axis=-1)
    h = jnp.maximum(h, 0.0)
    h = jnp.dot(h.astype(jnp.bfloat16), params["w2"].T,
                preferred_element_type=jnp.float32) + params["b2"]
    h = _layer_norm(h, params["g2"], params["beta2"], axis=-1)
    h = jnp.maximum(h, 0.0)
    z = jnp.dot(h.astype(jnp.bfloat16), params["w3"].T,
                preferred_element_type=jnp.float32) + params["b3"]
    return max_ac * jnp.tanh(z)


if __name__ == "__main__":
    # Small synthetic problem consistent with the module:
    #   ob_dim=16, hidden_dims=(32, 32), ac_dim=8, max_ac=1.0
    # batch=300 so both the multi-step grid (block_b=128 -> 3 steps) and the
    # default-tile / megacore-split path (-> 2 steps) plus padding are exercised.
    B, OB_DIM, AC_DIM = 300, 16, 8
    HIDDEN = (32, 32)
    MAX_AC = 1.0

    key = jax.random.PRNGKey(0)
    k_ob, k_mean, k_std, k_par = jax.random.split(key, 4)

    ob = jax.random.normal(k_ob, (B, OB_DIM), dtype=jnp.float32)
    rms_mean = 0.1 * jax.random.normal(k_mean, (1, OB_DIM), dtype=jnp.float32)
    rms_std = 1.0 + 0.1 * jnp.abs(jax.random.normal(k_std, (1, OB_DIM),
                                                    dtype=jnp.float32))
    params = make_actor_params(k_par, OB_DIM, HIDDEN, AC_DIM)

    ref = actor_forward_ref(ob, rms_mean, rms_std, params, MAX_AC)

    # Explicit small tile: 3 grid steps, padded batch 384.
    ac_small = actor_forward(ob, rms_mean, rms_std, params, MAX_AC, block_b=128)
    ac_small = jax.block_until_ready(ac_small)
    assert ac_small.shape == (B, AC_DIM)
    assert jnp.allclose(ac_small, ref, atol=2e-3, rtol=2e-2), (
        float(jnp.max(jnp.abs(ac_small - ref))))

    # Default tile: single tile would cover the batch -> split into 2 grid steps.
    ac_big = actor_forward(ob, rms_mean, rms_std, params, MAX_AC)
    ac_big = jax.block_until_ready(ac_big)
    assert ac_big.shape == (B, AC_DIM)
    assert jnp.allclose(ac_big, ref, atol=2e-3, rtol=2e-2), (
        float(jnp.max(jnp.abs(ac_big - ref))))

    print("KERNEL_OK")
</pallas_src>

<mosaic_0001>
module attributes {stable_mosaic.version = 11 : i64} {
  func.func @actor_kernel(%arg0: i32, %arg1: memref<16x128xf32, #tpu.memory_space<vmem>>, %arg2: memref<32x9xf32, #tpu.memory_space<vmem>>, %arg3: memref<32x16xbf16, #tpu.memory_space<vmem>>, %arg4: memref<32x32xbf16, #tpu.memory_space<vmem>>, %arg5: memref<8x32xbf16, #tpu.memory_space<vmem>>, %arg6: memref<8x128xf32, #tpu.memory_space<vmem>>) attributes {dimension_semantics = [#tpu.dimension_semantics<parallel>], iteration_bounds = array<i64: 3>, scalar_prefetch = 0 : i64, scratch_operands = 0 : i64, tpu.core_type = #tpu.core_type<tc>, window_params = [{transform_indices = @transform_0, window_bounds = array<i64: 16, 128>}, {pipeline_mode = #tpu.pipeline_mode<synchronous>, transform_indices = @transform_1, window_bounds = array<i64: 32, 9>}, {pipeline_mode = #tpu.pipeline_mode<synchronous>, transform_indices = @transform_2, window_bounds = array<i64: 32, 16>}, {pipeline_mode = #tpu.pipeline_mode<synchronous>, transform_indices = @transform_3, window_bounds = array<i64: 32, 32>}, {pipeline_mode = #tpu.pipeline_mode<synchronous>, transform_indices = @transform_4, window_bounds = array<i64: 8, 32>}, {transform_indices = @transform_5, window_bounds = array<i64: 8, 128>}]} {
    %c0 = arith.constant 0 : index
    %c0_0 = arith.constant 0 : index
    %0 = vector.load %arg2[%c0, %c0_0] : memref<32x9xf32, #tpu.memory_space<vmem>>, vector<32x9xf32>
    %1 = vector.extract_strided_slice %0 {offsets = [0, 0], sizes = [16, 1], strides = [1, 1]} : vector<32x9xf32> to vector<16x1xf32>
    %2 = vector.extract_strided_slice %0 {offsets = [0, 1], sizes = [16, 1], strides = [1, 1]} : vector<32x9xf32> to vector<16x1xf32>
    %3 = vector.extract_strided_slice %0 {offsets = [0, 2], sizes = [32, 1], strides = [1, 1]} : vector<32x9xf32> to vector<32x1xf32>
    %4 = vector.extract_strided_slice %0 {offsets = [0, 3], sizes = [32, 1], strides = [1, 1]} : vector<32x9xf32> to vector<32x1xf32>
    %5 = vector.extract_strided_slice %0 {offsets = [0, 4], sizes = [32, 1], strides = [1, 1]} : vector<32x9xf32> to vector<32x1xf32>
    %6 = vector.extract_strided_slice %0 {offsets = [0, 5], sizes = [32, 1], strides = [1, 1]} : vector<32x9xf32> to vector<32x1xf32>
    %7 = vector.extract_strided_slice %0 {offsets = [0, 6], sizes = [32, 1], strides = [1, 1]} : vector<32x9xf32> to vector<32x1xf32>
    %8 = vector.extract_strided_slice %0 {offsets = [0, 7], sizes = [32, 1], strides = [1, 1]} : vector<32x9xf32> to vector<32x1xf32>
    %9 = vector.extract_strided_slice %0 {offsets = [0, 8], sizes = [8, 1], strides = [1, 1]} : vector<32x9xf32> to vector<8x1xf32>
    %c0_1 = arith.constant 0 : index
    %c0_2 = arith.constant 0 : index
    %10 = vector.load %arg1[%c0_1, %c0_2] : memref<16x128xf32, #tpu.memory_space<vmem>>, vector<16x128xf32>
    %11 = vector.broadcast %1 : vector<16x1xf32> to vector<16x128xf32>
    %12 = arith.mulf %10, %11 : vector<16x128xf32>
    %13 = vector.broadcast %2 : vector<16x1xf32> to vector<16x128xf32>
    %14 = arith.addf %12, %13 : vector<16x128xf32>
    %cst = arith.constant -5.000000e+00 : f32
    %cst_3 = arith.constant 5.000000e+00 : f32
    %15 = vector.broadcast %cst : f32 to vector<16x128xf32>
    %16 = arith.maximumf %15, %14 : vector<16x128xf32>
    %17 = vector.broadcast %cst_3 : f32 to vector<16x128xf32>
    %18 = arith.minimumf %17, %16 : vector<16x128xf32>
    %c0_4 = arith.constant 0 : index
    %c0_5 = arith.constant 0 : index
    %19 = vector.load %arg3[%c0_4, %c0_5] : memref<32x16xbf16, #tpu.memory_space<vmem>>, vector<32x16xbf16>
    %20 = arith.truncf %18 : vector<16x128xf32> to vector<16x128xbf16>
    %cst_6 = arith.constant dense<0.000000e+00> : vector<32x128xf32>
    %21 = tpu.matmul %19, %20, %cst_6 {dimension_numbers = #tpu.dot_dimension_numbers<[1], [0], [0], [1], [0, 0, 1, 1], [], []>} : vector<32x16xbf16>, vector<16x128xbf16>, vector<32x128xf32> -> vector<32x128xf32>
    %22 = vector.broadcast %3 : vector<32x1xf32> to vector<32x128xf32>
    %23 = arith.addf %21, %22 : vector<32x128xf32>
    %cst_7 = arith.constant dense<0.000000e+00> : vector<128xf32>
    %24 = vector.multi_reduction <add>, %23, %cst_7 [0] : vector<32x128xf32> to vector<128xf32>
    %25 = vector.shape_cast %24 : vector<128xf32> to vector<1x128xf32>
    %cst_8 = arith.constant 3.200000e+01 : f32
    %26 = vector.broadcast %cst_8 : f32 to vector<1x128xf32>
    %27 = arith.divf %25, %26 : vector<1x128xf32>
    %28 = vector.broadcast %27 : vector<1x128xf32> to vector<32x128xf32>
    %29 = arith.subf %23, %28 : vector<32x128xf32>
    %30 = arith.mulf %29, %29 : vector<32x128xf32>
    %cst_9 = arith.constant dense<0.000000e+00> : vector<128xf32>
    %31 = vector.multi_reduction <add>, %30, %cst_9 [0] : vector<32x128xf32> to vector<128xf32>
    %32 = vector.shape_cast %31 : vector<128xf32> to vector<1x128xf32>
    %cst_10 = arith.constant 3.200000e+01 : f32
    %33 = vector.broadcast %cst_10 : f32 to vector<1x128xf32>
    %34 = arith.divf %32, %33 : vector<1x128xf32>
    %35 = vector.broadcast %27 : vector<1x128xf32> to vector<32x128xf32>
    %36 = arith.subf %23, %35 : vector<32x128xf32>
    %cst_11 = arith.constant 9.99999974E-6 : f32
    %37 = vector.broadcast %cst_11 : f32 to vector<1x128xf32>
    %38 = arith.addf %34, %37 : vector<1x128xf32>
    %39 = math.rsqrt %38 : vector<1x128xf32>
    %40 = vector.broadcast %39 : vector<1x128xf32> to vector<32x128xf32>
    %41 = arith.mulf %36, %40 : vector<32x128xf32>
    %42 = vector.broadcast %4 : vector<32x1xf32> to vector<32x128xf32>
    %43 = arith.mulf %41, %42 : vector<32x128xf32>
    %44 = vector.broadcast %5 : vector<32x1xf32> to vector<32x128xf32>
    %45 = arith.addf %43, %44 : vector<32x128xf32>
    %cst_12 = arith.constant 0.000000e+00 : f32
    %46 = vector.broadcast %cst_12 : f32 to vector<32x128xf32>
    %47 = arith.maximumf %45, %46 : vector<32x128xf32>
    %c0_13 = arith.constant 0 : index
    %c0_14 = arith.constant 0 : index
    %48 = vector.load %arg4[%c0_13, %c0_14] : memref<32x32xbf16, #tpu.memory_space<vmem>>, vector<32x32xbf16>
    %49 = arith.truncf %47 : vector<32x128xf32> to vector<32x128xbf16>
    %cst_15 = arith.constant dense<0.000000e+00> : vector<32x128xf32>
    %50 = tpu.matmul %48, %49, %cst_15 {dimension_numbers = #tpu.dot_dimension_numbers<[1], [0], [0], [1], [0, 0, 1, 1], [], []>} : vector<32x32xbf16>, vector<32x128xbf16>, vector<32x128xf32> -> vector<32x128xf32>
    %51 = vector.broadcast %6 : vector<32x1xf32> to vector<32x128xf32>
    %52 = arith.addf %50, %51 : vector<32x128xf32>
    %cst_16 = arith.constant dense<0.000000e+00> : vector<128xf32>
    %53 = vector.multi_reduction <add>, %52, %cst_16 [0] : vector<32x128xf32> to vector<128xf32>
    %54 = vector.shape_cast %53 : vector<128xf32> to vector<1x128xf32>
    %cst_17 = arith.constant 3.200000e+01 : f32
    %55 = vector.broadcast %cst_17 : f32 to vector<1x128xf32>
    %56 = arith.divf %54, %55 : vector<1x128xf32>
    %57 = vector.broadcast %56 : vector<1x128xf32> to vector<32x128xf32>
    %58 = arith.subf %52, %57 : vector<32x128xf32>
    %59 = arith.mulf %58, %58 : vector<32x128xf32>
    %cst_18 = arith.constant dense<0.000000e+00> : vector<128xf32>
    %60 = vector.multi_reduction <add>, %59, %cst_18 [0] : vector<32x128xf32> to vector<128xf32>
    %61 = vector.shape_cast %60 : vector<128xf32> to vector<1x128xf32>
    %cst_19 = arith.constant 3.200000e+01 : f32
    %62 = vector.broadcast %cst_19 : f32 to vector<1x128xf32>
    %63 = arith.divf %61, %62 : vector<1x128xf32>
    %64 = vector.broadcast %56 : vector<1x128xf32> to vector<32x128xf32>
    %65 = arith.subf %52, %64 : vector<32x128xf32>
    %cst_20 = arith.constant 9.99999974E-6 : f32
    %66 = vector.broadcast %cst_20 : f32 to vector<1x128xf32>
    %67 = arith.addf %63, %66 : vector<1x128xf32>
    %68 = math.rsqrt %67 : vector<1x128xf32>
    %69 = vector.broadcast %68 : vector<1x128xf32> to vector<32x128xf32>
    %70 = arith.mulf %65, %69 : vector<32x128xf32>
    %71 = vector.broadcast %7 : vector<32x1xf32> to vector<32x128xf32>
    %72 = arith.mulf %70, %71 : vector<32x128xf32>
    %73 = vector.broadcast %8 : vector<32x1xf32> to vector<32x128xf32>
    %74 = arith.addf %72, %73 : vector<32x128xf32>
    %cst_21 = arith.constant 0.000000e+00 : f32
    %75 = vector.broadcast %cst_21 : f32 to vector<32x128xf32>
    %76 = arith.maximumf %74, %75 : vector<32x128xf32>
    %c0_22 = arith.constant 0 : index
    %c0_23 = arith.constant 0 : index
    %77 = vector.load %arg5[%c0_22, %c0_23] : memref<8x32xbf16, #tpu.memory_space<vmem>>, vector<8x32xbf16>
    %78 = arith.truncf %76 : vector<32x128xf32> to vector<32x128xbf16>
    %cst_24 = arith.constant dense<0.000000e+00> : vector<8x128xf32>
    %79 = tpu.matmul %77, %78, %cst_24 {dimension_numbers = #tpu.dot_dimension_numbers<[1], [0], [0], [1], [0, 0, 1, 1], [], []>} : vector<8x32xbf16>, vector<32x128xbf16>, vector<8x128xf32> -> vector<8x128xf32>
    %80 = vector.broadcast %9 : vector<8x1xf32> to vector<8x128xf32>
    %81 = arith.addf %79, %80 : vector<8x128xf32>
    %82 = math.tanh %81 : vector<8x128xf32>
    %cst_25 = arith.constant 1.000000e+00 : f32
    %83 = vector.broadcast %cst_25 : f32 to vector<8x128xf32>
    %84 = arith.mulf %83, %82 : vector<8x128xf32>
    %c0_26 = arith.constant 0 : index
    %c0_27 = arith.constant 0 : index
    %85 = vector.load %arg6[%c0_26, %c0_27] : memref<8x128xf32, #tpu.memory_space<vmem>>, vector<8x128xf32>
    tpu.vector_store %arg6[%c0_26, %c0_27], %84 {strides = array<i32>} : memref<8x128xf32, #tpu.memory_space<vmem>>, vector<8x128xf32>,
    return
  }
  func.func @transform_0(%arg0: i32) -> (i32, i32) {
    %c0_i32 = arith.constant 0 : i32
    %c0_i32_0 = arith.constant 0 : i32
    return %c0_i32, %arg0 : i32, i32
  }
  func.func @transform_1(%arg0: i32) -> (i32, i32) {
    %c0_i32 = arith.constant 0 : i32
    %c0_i32_0 = arith.constant 0 : i32
    %c0_i32_1 = arith.constant 0 : i32
    return %c0_i32, %c0_i32_0 : i32, i32
  }
  func.func @transform_2(%arg0: i32) -> (i32, i32) {
    %c0_i32 = arith.constant 0 : i32
    %c0_i32_0 = arith.constant 0 : i32
    %c0_i32_1 = arith.constant 0 : i32
    return %c0_i32, %c0_i32_0 : i32, i32
  }
  func.func @transform_3(%arg0: i32) -> (i32, i32) {
    %c0_i32 = arith.constant 0 : i32
    %c0_i32_0 = arith.constant 0 : i32
    %c0_i32_1 = arith.constant 0 : i32
    return %c0_i32, %c0_i32_0 : i32, i32
  }
  func.func @transform_4(%arg0: i32) -> (i32, i32) {
    %c0_i32 = arith.constant 0 : i32
    %c0_i32_0 = arith.constant 0 : i32
    %c0_i32_1 = arith.constant 0 : i32
    return %c0_i32, %c0_i32_0 : i32, i32
  }
  func.func @transform_5(%arg0: i32) -> (i32, i32) {
    %c0_i32 = arith.constant 0 : i32
    %c0_i32_0 = arith.constant 0 : i32
    return %c0_i32, %arg0 : i32, i32
  }
}

</mosaic_0001>

<llo_original>
// kernel: tpu_custom_call.1
$region0: #{tpu_custom_call.1}
  #allocation0 [shape = 'u32[]', space=smem, size = 0x4, offset = 0x4, fixed_abs, tag = 'smem constant byte address 0x4 - core index']
  #allocation1 [shape = 'u32[144,128]{1,0:T(1,128)}', space=vmem, size = 0x12000, scoped, tag = 'internal scratch']
  %s0 = inlined_call_operand.vmem [shape: f32[16,384], index: 0, kind: input, shape index: {}]
  %s1 = inlined_call_operand.vmem [shape: f32[32,9], index: 1, kind: input, shape index: {}]
  %s2 = inlined_call_operand.vmem [shape: bf16[32,16], index: 2, kind: input, shape index: {}]
  %s3 = inlined_call_operand.hbm [shape: bf16[32,32], index: 3, kind: input, shape index: {}]
  %s4 = inlined_call_operand.vmem [shape: bf16[8,32], index: 4, kind: input, shape index: {}]
  %s5 = inlined_call_operand.hbm [shape: f32[8,384], index: 5, kind: output, shape index: {}]
  %s6 = sld [smem:[#allocation0]]
  $region95: #{tpu_custom_call.1} parent=0
    _
  %s8 = ssub.s32 1, %s6
  %s9 = scalar_select 0, %s8, %s6
  $region1: #{tpu_custom_call.1} parent=0
    #allocation2 [shape = 'u8[16384]{0}', space=vmem, size = 0x4000, scoped, tag = 'input window, operand 0']
    #allocation3 [shape = 'u8[8192]{0}', space=vmem, size = 0x2000, scoped, tag = 'input window, operand 3, single buffered']
    #allocation4 [shape = 's32[2]{0}', space=sflag, size = 0x8, scoped, tag = 'scoped memory for tpu_custom_call.1']
    #allocation5 [shape = 's32[2]{0}', space=sflag, size = 0x8, scoped, tag = 'scoped memory for tpu_custom_call.1']
    #allocation6 [shape = 'u8[8192]{0}', space=vmem, size = 0x2000, scoped, tag = 'output window, operand 0']
    %10 = vsyncpa [#allocation4], 0
    %11 = vsyncpa [#allocation5], 0
    %s12 = scalar_lea.sflag [#allocation5], 1
    %13 = vsyncpa %s12, 0
    loop: start=0, step=1, limit=5
    $region2: #{tpu_custom_call.1} parent=1 // loop_pre_header
      _
    $region3: #{tpu_custom_call.1} parent=1 // loop_header
      %s15 = sphi 0, %s19
      %p16 = scmp.ge.s32.totalorder %s15, 5
      %s25 = sphi 0, %s27
      %s28 = sphi 0, %s25
      %s29 = sphi 0, %s28
      %s45 = sphi 0, %s29
      %s49 = sphi 0, %s49
      %s51 = sphi 0, %s49
      %s52 = sphi 0, %s51
      %s66 = sphi 0, %s52
      %s70 = sphi 0, %s70
      %s72 = sphi 0, %s70
      %s73 = sphi 0, %s72
      %s87 = sphi 0, %s73
      %s91 = sphi 0, %s91
      %s93 = sphi 0, %s91
      %s94 = sphi 0, %s93
      %s108 = sphi 0, %s94
      %s112 = sphi 0, %s112
      %s114 = sphi 0, %s112
      %s115 = sphi 0, %s114
      %s129 = sphi 0, %s115
      %s135 = sphi 0, %s137
      %s138 = sphi 0, %s135
      %s139 = sphi 0, %s138
      %s155 = sphi 0, %s139
    $region4: #{tpu_custom_call.1} parent=1 // loop_header_branch
      %18 = sbr.rel (%p16) target = $region8
    $region5: #{tpu_custom_call.1} parent=1 // loop_body
      %s20 = ssub.s32 %s15, 1
      %s21 = ssub.s32 %s15, 2
      %s22 = sadd.s32 %s15, 1
      %s23 = ssub.s32 %s15, %s22
      %p24 = scmp.eq.s32.totalorder %s23, 0
      %s26 = sadd.s32 %s25, 1
      %s27 = scalar_select %p24, %s25, %s26
      %p30 = pneg %p24
      %p31 = scmp.eq.s32.totalorder %s15, 2
      %p32 = por %p30, %p31
      %p33 = scmp.ne.s32.totalorder %s25, %s28
      %p34 = scmp.eq.s32.totalorder %s15, 0
      %p35 = por %p33, %p34
      %p36 = scmp.ne.s32.totalorder %s25, %s28
      %p37 = scmp.eq.s32.totalorder %s20, 2
      %p38 = por %p36, %p37
      %p39 = scmp.ne.s32.totalorder %s28, %s29
      %p40 = scmp.eq.s32.totalorder %s20, 0
      %p41 = por %p39, %p40
      %p42 = scmp.ne.s32.totalorder %s28, %s29
      %p43 = scmp.eq.s32.totalorder %s21, 2
      %p44 = por %p42, %p43
      %p46 = scmp.ne.s32.totalorder %s29, %s45
      %p47 = scmp.eq.s32.totalorder %s21, 0
      %p48 = por %p46, %p47
      %s50 = sadd.s32 %s49, 1
      %p53 = scmp.eq.s32.totalorder %s15, 2
      %p54 = scmp.ne.s32.totalorder %s49, %s51
      %p55 = scmp.eq.s32.totalorder %s15, 0
      %p56 = por %p54, %p55
      %p57 = scmp.ne.s32.totalorder %s49, %s51
      %p58 = scmp.eq.s32.totalorder %s20, 2
      %p59 = por %p57, %p58
      %p60 = scmp.ne.s32.totalorder %s51, %s52
      %p61 = scmp.eq.s32.totalorder %s20, 0
      %p62 = por %p60, %p61
      %p63 = scmp.ne.s32.totalorder %s51, %s52
      %p64 = scmp.eq.s32.totalorder %s21, 2
      %p65 = por %p63, %p64
      %p67 = scmp.ne.s32.totalorder %s52, %s66
      %p68 = scmp.eq.s32.totalorder %s21, 0
      %p69 = por %p67, %p68
      %s71 = sadd.s32 %s70, 1
      %p74 = scmp.eq.s32.totalorder %s15, 2
      %p75 = scmp.ne.s32.totalorder %s70, %s72
      %p76 = scmp.eq.s32.totalorder %s15, 0
      %p77 = por %p75, %p76
      %p78 = scmp.ne.s32.totalorder %s70, %s72
      %p79 = scmp.eq.s32.totalorder %s20, 2
      %p80 = por %p78, %p79
      %p81 = scmp.ne.s32.totalorder %s72, %s73
      %p82 = scmp.eq.s32.totalorder %s20, 0
      %p83 = por %p81, %p82
      %p84 = scmp.ne.s32.totalorder %s72, %s73
      %p85 = scmp.eq.s32.totalorder %s21, 2
      %p86 = por %p84, %p85
      %p88 = scmp.ne.s32.totalorder %s73, %s87
      %p89 = scmp.eq.s32.totalorder %s21, 0
      %p90 = por %p88, %p89
      %s92 = sadd.s32 %s91, 1
      %p95 = scmp.eq.s32.totalorder %s15, 2
      %p96 = scmp.ne.s32.totalorder %s91, %s93
      %p97 = scmp.eq.s32.totalorder %s15, 0
      %p98 = por %p96, %p97
      %p99 = scmp.ne.s32.totalorder %s91, %s93
      %p100 = scmp.eq.s32.totalorder %s20, 2
      %p101 = por %p99, %p100
      %p102 = scmp.ne.s32.totalorder %s93, %s94
      %p103 = scmp.eq.s32.totalorder %s20, 0
      %p104 = por %p102, %p103
      %p105 = scmp.ne.s32.totalorder %s93, %s94
      %p106 = scmp.eq.s32.totalorder %s21, 2
      %p107 = por %p105, %p106
      %p109 = scmp.ne.s32.totalorder %s94, %s108
      %p110 = scmp.eq.s32.totalorder %s21, 0
      %p111 = por %p109, %p110
      %s113 = sadd.s32 %s112, 1
      %p116 = scmp.eq.s32.totalorder %s15, 2
      %p117 = scmp.ne.s32.totalorder %s112, %s114
      %p118 = scmp.eq.s32.totalorder %s15, 0
      %p119 = por %p117, %p118
      %p120 = scmp.ne.s32.totalorder %s112, %s114
      %p121 = scmp.eq.s32.totalorder %s20, 2
      %p122 = por %p120, %p121
      %p123 = scmp.ne.s32.totalorder %s114, %s115
      %p124 = scmp.eq.s32.totalorder %s20, 0
      %p125 = por %p123, %p124
      %p126 = scmp.ne.s32.totalorder %s114, %s115
      %p127 = scmp.eq.s32.totalorder %s21, 2
      %p128 = por %p126, %p127
      %p130 = scmp.ne.s32.totalorder %s115, %s129
      %p131 = scmp.eq.s32.totalorder %s21, 0
      %p132 = por %p130, %p131
      %s133 = ssub.s32 %s15, %s22
      %p134 = scmp.eq.s32.totalorder %s133, 0
      %s136 = sadd.s32 %s135, 1
      %s137 = scalar_select %p134, %s135, %s136
      %p140 = pneg %p134
      %p141 = scmp.eq.s32.totalorder %s15, 2
      %p142 = por %p140, %p141
      %p143 = scmp.ne.s32.totalorder %s135, %s138
      %p144 = scmp.eq.s32.totalorder %s15, 0
      %p145 = por %p143, %p144
      %p146 = scmp.ne.s32.totalorder %s135, %s138
      %p147 = scmp.eq.s32.totalorder %s20, 2
      %p148 = por %p146, %p147
      %p149 = scmp.ne.s32.totalorder %s138, %s139
      %p150 = scmp.eq.s32.totalorder %s20, 0
      %p151 = por %p149, %p150
      %p152 = scmp.ne.s32.totalorder %s138, %s139
      %p153 = scmp.eq.s32.totalorder %s21, 2
      %p154 = por %p152, %p153
      %p156 = scmp.ne.s32.totalorder %s139, %s155
      %p157 = scmp.eq.s32.totalorder %s21, 0
      %p158 = por %p156, %p157
      %p159 = scmp.le.s32.totalorder 1, %s15
      %p160 = scmp.lt.s32.totalorder %s15, 4
      %p161 = pnand %p159, %p160
      %p162 = pneg %p161
      // Predicated region
      $region9: #{tpu_custom_call.1} parent=5 // pred_check
        _
      $region10: #{tpu_custom_call.1} parent=5 // pred_check_branch
        %164 = sbr.rel (%p161) target = $region12
      $region11: #{tpu_custom_call.1} parent=5 // pred_region
        %s165 = ssub.s32 %s15, 1
        // Predicated region
        $region13: #{tpu_custom_call.1} parent=11 // pred_check
          %p166 = pneg %p62
        $region14: #{tpu_custom_call.1} parent=11 // pred_check_branch
          %168 = sbr.rel (%p166) target = $region16
        $region15: #{tpu_custom_call.1} parent=11 // pred_region
          _
        $region16: #{tpu_custom_call.1} parent=11 // pred_fallthru
          _
        // Predicated region
        $region17: #{tpu_custom_call.1} parent=11 // pred_check
          %p169 = pneg %p83
        $region18: #{tpu_custom_call.1} parent=11 // pred_check_branch
          %171 = sbr.rel (%p169) target = $region20
        $region19: #{tpu_custom_call.1} parent=11 // pred_region
          _
        $region20: #{tpu_custom_call.1} parent=11 // pred_fallthru
          _
        // Predicated region
        $region21: #{tpu_custom_call.1} parent=11 // pred_check
          %p172 = pneg %p104
        $region22: #{tpu_custom_call.1} parent=11 // pred_check_branch
          %174 = sbr.rel (%p172) target = $region24
        $region23: #{tpu_custom_call.1} parent=11 // pred_region
          %s176 = ssub.s32 256, 256
          %177 = vsyncadd [#allocation4], %s176
          %s178 = sshll.u32 [#allocation3], 4
          %s179 = int_to_ptr.vmem [resolvable:$true] %s178
          %184 = dma.hbm_to_vmem [thread:$0]  %s3, 256, %s179, [#allocation4], 64, 64, 4
        $region24: #{tpu_custom_call.1} parent=11 // pred_fallthru
          _
        // Predicated region
        $region25: #{tpu_custom_call.1} parent=11 // pred_check
          %p185 = pneg %p125
        $region26: #{tpu_custom_call.1} parent=11 // pred_check_branch
          %187 = sbr.rel (%p185) target = $region28
        $region27: #{tpu_custom_call.1} parent=11 // pred_region
          _
        $region28: #{tpu_custom_call.1} parent=11 // pred_fallthru
          _
      $region12: #{tpu_custom_call.1} parent=5 // pred_fallthru
        _
      %p188 = scmp.lt.s32.totalorder %s15, 3
      // Predicated region
      $region29: #{tpu_custom_call.1} parent=5 // pred_check
        %p189 = pneg %p188
      $region30: #{tpu_custom_call.1} parent=5 // pred_check_branch
        %191 = sbr.rel (%p189) target = $region32
      $region31: #{tpu_custom_call.1} parent=5 // pred_region
        // Predicated region
        $region33: #{tpu_custom_call.1} parent=31 // pred_check
          %p192 = pneg %p35
        $region34: #{tpu_custom_call.1} parent=31 // pred_check_branch
          %194 = sbr.rel (%p192) target = $region36
        $region35: #{tpu_custom_call.1} parent=31 // pred_region
          %s195 = sand.u32 %s25, 1
          %s196 = sand.u32 %s25, 1
          %s197 = smul.addr %s196, 16
          %s198 = scalar_lea.vmem [#allocation2], %s197
          %s199 = smul.addr %s15, 8
          %s200 = scalar_lea.vmem %s0, %s199
          // Predicated region
          $region37: #{tpu_custom_call.1} parent=35 // pred_check
            _
          $region38: #{tpu_custom_call.1} parent=35 // pred_check_branch
            %202 = sbr.rel (0) target = $region40
          $region39: #{tpu_custom_call.1} parent=35 // pred_region
            // Predicated region
            $region41: #{tpu_custom_call.1} parent=39 // pred_check
              _
            $region42: #{tpu_custom_call.1} parent=39 // pred_check_branch
              %204 = sbr.rel (0) target = $region44
            $region43: #{tpu_custom_call.1} parent=39 // pred_region
              // Predicated region
              $region56: #{tpu_custom_call.1} parent=43 // pred_check
                _
              $region57: #{tpu_custom_call.1} parent=43 // pred_check_branch
                %222 = sbr.rel (0) target = $region59
              $region58: #{tpu_custom_call.1} parent=43 // pred_region
                loop: start=0, step=1, limit=1
                $region60: #{tpu_custom_call.1} parent=58 // loop_pre_header
                  _
                $region61: #{tpu_custom_call.1} parent=58 // loop_header
                  %s224 = sphi 0, %s228
                  %p225 = scmp.ge.s32.totalorder %s224, 1
                  %s229 = sphi %s200, %s200
                  %s230 = sphi %s198, %s198
                $region62: #{tpu_custom_call.1} parent=58 // loop_header_branch
                  %227 = sbr.rel (%p225) target = $region66
                $region63: #{tpu_custom_call.1} parent=58 // loop_body
                  %v231 = vld [vmem:[%s229] sm:$0xff]
                  %232 = vst [vmem:[%s230] sm:$0xff] %v231
                  %v233 = vld [vmem:[%s229 + $0x18] sm:$0xff]
                  %234 = vst [vmem:[%s230 + $0x8] sm:$0xff] %v233
                $region64: #{tpu_custom_call.1} parent=58 // loop_footer
                  %s228 = sadd.s32 1, %s224
                $region65: #{tpu_custom_call.1} parent=58 // loop_footer_branch
                  %223 = sbr.rel target = $region61
                $region66: #{tpu_custom_call.1} parent=58 // loop_exit
                  _
              $region59: #{tpu_custom_call.1} parent=43 // pred_fallthru
                _
              // Predicated region
              $region67: #{tpu_custom_call.1} parent=43 // pred_check
                _
              $region68: #{tpu_custom_call.1} parent=43 // pred_check_branch
                %236 = sbr.rel target = $region70
              $region69: #{tpu_custom_call.1} parent=43 // pred_region
                _
              $region70: #{tpu_custom_call.1} parent=43 // pred_fallthru
                _
            $region44: #{tpu_custom_call.1} parent=39 // pred_fallthru
              _
            // Predicated region
            $region45: #{tpu_custom_call.1} parent=39 // pred_check
              _
            $region46: #{tpu_custom_call.1} parent=39 // pred_check_branch
              %206 = sbr.rel target = $region48
            $region47: #{tpu_custom_call.1} parent=39 // pred_region
              %s208 = ssub.s32 256, 1
              loop: start=0, step=1, limit=1
              $region49: #{tpu_custom_call.1} parent=47 // loop_pre_header
                _
              $region50: #{tpu_custom_call.1} parent=47 // loop_header
                %s210 = sphi 0, %s214
                %p211 = scmp.ge.s32.totalorder %s210, 1
                %s215 = sphi %s200, %s200
                %s216 = sphi %s198, %s198
              $region51: #{tpu_custom_call.1} parent=47 // loop_header_branch
                %213 = sbr.rel (%p211) target = $region55
              $region52: #{tpu_custom_call.1} parent=47 // loop_body
                %v217 = vld [vmem:[%s215] sm:%s208]
                %218 = vst [vmem:[%s216] sm:%s208] %v217
                %v219 = vld [vmem:[%s215 + $0x18] sm:%s208]
                %220 = vst [vmem:[%s216 + $0x8] sm:%s208] %v219
              $region53: #{tpu_custom_call.1} parent=47 // loop_footer
                %s214 = sadd.s32 1, %s210
              $region54: #{tpu_custom_call.1} parent=47 // loop_footer_branch
                %209 = sbr.rel target = $region50
              $region55: #{tpu_custom_call.1} parent=47 // loop_exit
                _
            $region48: #{tpu_custom_call.1} parent=39 // pred_fallthru
              _
          $region40: #{tpu_custom_call.1} parent=35 // pred_fallthru
            _
          %237 = vnop
        $region36: #{tpu_custom_call.1} parent=31 // pred_fallthru
          _
      $region32: #{tpu_custom_call.1} parent=5 // pred_fallthru
        _
      %p238 = scmp.le.s32.totalorder 1, %s15
      %p239 = scmp.lt.s32.totalorder %s15, 4
      %p240 = pnand %p238, %p239
      %p241 = pneg %p240
      // Predicated region
      $region71: #{tpu_custom_call.1} parent=5 // pred_check
        _
      $region72: #{tpu_custom_call.1} parent=5 // pred_check_branch
        %243 = sbr.rel (%p240) target = $region74
      $region73: #{tpu_custom_call.1} parent=5 // pred_region
        %s244 = ssub.s32 %s15, 1
        %s245 = sand.u32 %s28, 1
        %s246 = sand.u32 %s28, 1
        %s247 = smul.addr %s246, 16
        %s248 = scalar_lea.vmem [#allocation2], %s247
        // Predicated region
        $region75: #{tpu_custom_call.1} parent=73 // pred_check
          %p249 = pneg %p41
        $region76: #{tpu_custom_call.1} parent=73 // pred_check_branch
          %251 = sbr.rel (%p249) target = $region78
        $region77: #{tpu_custom_call.1} parent=73 // pred_region
          _
        $region78: #{tpu_custom_call.1} parent=73 // pred_fallthru
          _
        // Predicated region
        $region79: #{tpu_custom_call.1} parent=73 // pred_check
          %p252 = pneg %p104
        $region80: #{tpu_custom_call.1} parent=73 // pred_check_branch
          %254 = sbr.rel (%p252) target = $region82
        $region81: #{tpu_custom_call.1} parent=73 // pred_region
          %255 = dma.done [#allocation4], 256
        $region82: #{tpu_custom_call.1} parent=73 // pred_fallthru
          _
        %s256 = sand.u32 %s28, 1
        %s257 = sand.u32 %s28, 1
        %s258 = smul.addr %s257, 16
        %s259 = scalar_lea.vmem [#allocation2], %s258
        %p260 = pneg %p41
        %p261 = pneg %p38
        %p262 = pneg %p62
        %p263 = pneg %p59
        %p264 = pneg %p83
        %p265 = pneg %p80
        %p266 = pneg %p104
        %p267 = pneg %p101
        %p268 = pneg %p125
        %p269 = pneg %p122
        %p270 = pneg %p151
        %p271 = pneg %p148
        %s272 = sand.u32 %s138, 1
        %s273 = scalar_lea.sflag [#allocation5], %s272
        %s274 = sand.u32 %s138, 1
        %s275 = smul.addr %s274, 8
        %s276 = scalar_lea.vmem [#allocation6], %s275
        %v278 = vld [vmem:[%s1] sm:$0xff]
        %v279 = vld [vmem:[%s1 + $0x8] sm:$0xff]
        %v280 = vld [vmem:[%s1 + $0x10] sm:$0xff]
        %v281 = vld [vmem:[%s1 + $0x18] sm:$0xff]
        %v282 = vld [vmem:[%s248] sm:$0xff]
        %v283 = vld [vmem:[%s248 + $0x8] sm:$0xff]
        %285 = vset.pattern.permute.xlu0 0
        %286 = vperm.xlu0 %285, %v278
        %v287 = vpop.permute.xlu0 %286
        %290 = vset.pattern.permute.xlu0 0
        %291 = vperm.xlu0 %290, %v279
        %v292 = vpop.permute.xlu0 %291
        %v294 = vmul.f32 %v282, %v287
        %v295 = vmul.f32 %v283, %v292
        %296 = vset.pattern.permute.xlu0 1
        %297 = vperm.xlu0 %296, %v278
        %v298 = vpop.permute.xlu0 %297
        %300 = vset.pattern.permute.xlu0 1
        %301 = vperm.xlu0 %300, %v279
        %v302 = vpop.permute.xlu0 %301
        %v304 = vadd.f32 %v294, %v298
        %v305 = vadd.f32 %v295, %v302
        %v306 = vmax.f32 %v304, -5.0
        %v307 = vmax.f32 %v305, -5.0
        %v308 = vmin.f32 %v306, 5.0
        %v309 = vmin.f32 %v307, 5.0
        %v310 = vld [vmem:[%s2] sm:$0xf]
        %v311 = vld [vmem:[%s2 + $0x4] sm:$0xf]
        %v312 = vld [vmem:[%s2 + $0x8] sm:$0xf]
        %v313 = vld [vmem:[%s2 + $0xc] sm:$0xf]
        %v314 = vpack.c.bf16 %v309, %v308
        %315 = vset.pattern.permute.xlu0 2
        %316 = vperm.xlu0 %315, %v278
        %v317 = vpop.permute.xlu0 %316
        %319 = vset.pattern.permute.xlu0 2
        %320 = vperm.xlu0 %319, %v279
        %v321 = vpop.permute.xlu0 %320
        %324 = vset.pattern.permute.xlu0 2
        %325 = vperm.xlu0 %324, %v280
        %v326 = vpop.permute.xlu0 %325
        %329 = vset.pattern.permute.xlu0 2
        %330 = vperm.xlu0 %329, %v281
        %v331 = vpop.permute.xlu0 %330
        %v337 = vunpack.c.l.b16 %v310
        %v338 = vunpack.c.l.b16 %v311
        %v339 = vunpack.c.l.b16 %v312
        %v340 = vunpack.c.l.b16 %v313
        %v341 = vpack.c.b16 %v338, %v337
        %v342 = vpack.c.b16 %v340, %v339
        %vm343 = vcmask 130048
        %v345 = vsel %vm343, %v341, 0
        %v348 = vsel %vm343, %v342, 0
        %350 = vmatprep.subr.bf16.mxu0 0
        %351 = vmatpush1.bf16.msra.mxu0 0
        %352 = vmatprep.subr.bf16.mxu0 0
        %353 = vmatpush1.bf16.msra.mxu0 0
        %354 = vmatprep.subr.bf16.mxu0 0
        %355 = vmatpush1.bf16.msra.mxu0 0
        %356 = vmatprep.subr.bf16.mxu0 0
        %357 = vmatpush1.bf16.msra.mxu0 0
        %358 = vmatprep.subr.bf16.mxu0 0
        %359 = vmatpush1.bf16.msra.mxu0 0
        %360 = vmatprep.subr.bf16.mxu0 0
        %361 = vmatpush1.bf16.msra.mxu0 0
        %362 = vmatprep.subr.bf16.mxu0 0
        %363 = vmatpush1.bf16.msra.mxu0 0
        %364 = vmatprep.subr.bf16.mxu0 0
        %365 = vmatpush1.bf16.msra.mxu0 %v314
        %366 = vmatprep.subr.bf16.mxu0 0
        %367 = vmatpush2.bf16.msra.mxu0 0
        %368 = vmatprep.subr.bf16.mxu0 0
        %369 = vmatpush2.bf16.msra.mxu0 0
        %370 = vmatprep.subr.bf16.mxu0 0
        %371 = vmatpush2.bf16.msra.mxu0 0
        %372 = vmatprep.subr.bf16.mxu0 0
        %373 = vmatpush2.bf16.msra.mxu0 0
        %374 = vmatprep.subr.bf16.mxu0 0
        %375 = vmatpush2.bf16.msra.mxu0 0
        %376 = vmatprep.subr.bf16.mxu0 0
        %377 = vmatpush2.bf16.msra.mxu0 0
        %378 = vmatprep.subr.bf16.mxu0 0
        %379 = vmatpush2.bf16.msra.mxu0 0
        %380 = vmatprep.subr.bf16.mxu0 0
        %381 = vmatpush2.bf16.msra.mxu0 0
        %382 = vmatprep.mubr.bf16.mxu0 0
        %383 = vmatmul.mubr.bf16.gmra.mxu0 %v345
        %v384 = vpop.f32.mrf.mxu0
        %v385 = vadd.f32 %v317, %v384
        %v386 = vpop.f32.mrf.mxu0
        %v387 = vpop.f32.mrf.mxu0
        %v388 = vadd.f32 %v321, %v387
        %v389 = vpop.f32.mrf.mxu0
        %390 = vmatprep.mubr.bf16.mxu0 0
        %391 = vmatmul.mubr.bf16.gmra.mxu0 %v348
        %v392 = vpop.f32.mrf.mxu0
        %v393 = vadd.f32 %v326, %v392
        %v394 = vpop.f32.mrf.mxu0
        %v395 = vpop.f32.mrf.mxu0
        %v396 = vadd.f32 %v331, %v395
        %v397 = vpop.f32.mrf.mxu0
        %398 = vdwg.mxu0
        %v399 = vadd.f32 %v385, %v388
        %v400 = vadd.f32 %v399, %v393
        %v401 = vadd.f32 %v400, %v396
        %v402 = vrot.slane %v401, 4
        %v403 = vadd.f32 %v401, %v402
        %v404 = vrot.slane %v403, 2
        %v405 = vadd.f32 %v403, %v404
        %v406 = vrot.slane %v405, 1
        %v407 = vadd.f32 %v405, %v406
        %v408 = vrcp.pop 32.0
        %v409 = vmul.f32 %v407, %v408
        %v410 = vsub.f32 %v385, %v409
        %v411 = vsub.f32 %v388, %v409
        %v412 = vsub.f32 %v393, %v409
        %v413 = vsub.f32 %v396, %v409
        %v414 = vmul.f32 %v410, %v410
        %v415 = vmul.f32 %v411, %v411
        %v416 = vmul.f32 %v412, %v412
        %v417 = vmul.f32 %v413, %v413
        %v418 = vadd.f32 %v414, %v415
        %v419 = vadd.f32 %v418, %v416
        %v420 = vadd.f32 %v419, %v417
        %v421 = vrot.slane %v420, 4
        %v422 = vadd.f32 %v420, %v421
        %v423 = vrot.slane %v422, 2
        %v424 = vadd.f32 %v422, %v423
        %v425 = vrot.slane %v424, 1
        %v426 = vadd.f32 %v424, %v425
        %v427 = vmul.f32 %v426, %v408
        %v428 = vadd.f32 %v427, 1e-05
        %v429 = vrsqrt.pop %v428
        %v430 = vmul.f32 %v410, %v429
        %v431 = vmul.f32 %v411, %v429
        %v432 = vmul.f32 %v412, %v429
        %v433 = vmul.f32 %v413, %v429
        %434 = vset.pattern.permute.xlu0 3
        %435 = vperm.xlu0 %434, %v278
        %v436 = vpop.permute.xlu0 %435
        %438 = vset.pattern.permute.xlu0 3
        %439 = vperm.xlu0 %438, %v279
        %v440 = vpop.permute.xlu0 %439
        %442 = vset.pattern.permute.xlu0 3
        %443 = vperm.xlu0 %442, %v280
        %v444 = vpop.permute.xlu0 %443
        %446 = vset.pattern.permute.xlu0 3
        %447 = vperm.xlu0 %446, %v281
        %v448 = vpop.permute.xlu0 %447
        %v450 = vmul.f32 %v430, %v436
        %v451 = vmul.f32 %v431, %v440
        %v452 = vmul.f32 %v432, %v444
        %v453 = vmul.f32 %v433, %v448
        %454 = vset.pattern.permute.xlu0 4
        %455 = vperm.xlu0 %454, %v278
        %v456 = vpop.permute.xlu0 %455
        %458 = vset.pattern.permute.xlu0 4
        %459 = vperm.xlu0 %458, %v279
        %v460 = vpop.permute.xlu0 %459
        %462 = vset.pattern.permute.xlu0 4
        %463 = vperm.xlu0 %462, %v280
        %v464 = vpop.permute.xlu0 %463
        %466 = vset.pattern.permute.xlu0 4
        %467 = vperm.xlu0 %466, %v281
        %v468 = vpop.permute.xlu0 %467
        %v470 = vadd.f32 %v450, %v456
        %v471 = vadd.f32 %v451, %v460
        %v472 = vadd.f32 %v452, %v464
        %v473 = vadd.f32 %v453, %v468
        %v474 = vmax.f32 %v470, 0.0
        %v475 = vmax.f32 %v471, 0.0
        %v476 = vmax.f32 %v472, 0.0
        %v477 = vmax.f32 %v473, 0.0
        %v478 = vld [vmem:[#allocation3] sm:$0xf]
        %v479 = vld [vmem:[#allocation3 + $0x4] sm:$0xf]
        %v480 = vld [vmem:[#allocation3 + $0x8] sm:$0xf]
        %v481 = vld [vmem:[#allocation3 + $0xc] sm:$0xf]
        %v482 = vpack.c.bf16 %v475, %v474
        %v483 = vpack.c.bf16 %v477, %v476
        %484 = vset.pattern.permute.xlu0 5
        %485 = vperm.xlu0 %484, %v278
        %v486 = vpop.permute.xlu0 %485
        %488 = vset.pattern.permute.xlu0 5
        %489 = vperm.xlu0 %488, %v279
        %v490 = vpop.permute.xlu0 %489
        %492 = vset.pattern.permute.xlu0 5
        %493 = vperm.xlu0 %492, %v280
        %v494 = vpop.permute.xlu0 %493
        %496 = vset.pattern.permute.xlu0 5
        %497 = vperm.xlu0 %496, %v281
        %v498 = vpop.permute.xlu0 %497
        %v504 = vunpack.c.l.b16 %v478
        %v505 = vunpack.c.l.b16 %v479
        %v506 = vunpack.c.l.b16 %v480
        %v507 = vunpack.c.l.b16 %v481
        %v508 = vpack.c.b16 %v505, %v504
        %v509 = vpack.c.b16 %v507, %v506
        %vm510 = vcmask 261120
        %v512 = vsel %vm510, %v508, 0
        %v515 = vsel %vm510, %v509, 0
        %517 = vmatprep.subr.bf16.mxu0 0
        %518 = vmatpush1.bf16.msra.mxu0 0
        %519 = vmatprep.subr.bf16.mxu0 0
        %520 = vmatpush1.bf16.msra.mxu0 0
        %521 = vmatprep.subr.bf16.mxu0 0
        %522 = vmatpush1.bf16.msra.mxu0 0
        %523 = vmatprep.subr.bf16.mxu0 0
        %524 = vmatpush1.bf16.msra.mxu0 0
        %525 = vmatprep.subr.bf16.mxu0 0
        %526 = vmatpush1.bf16.msra.mxu0 0
        %527 = vmatprep.subr.bf16.mxu0 0
        %528 = vmatpush1.bf16.msra.mxu0 0
        %529 = vmatprep.subr.bf16.mxu0 0
        %530 = vmatpush1.bf16.msra.mxu0 %v483
        %531 = vmatprep.subr.bf16.mxu0 0
        %532 = vmatpush1.bf16.msra.mxu0 %v482
        %533 = vmatprep.subr.bf16.mxu0 0
        %534 = vmatpush2.bf16.msra.mxu0 0
        %535 = vmatprep.subr.bf16.mxu0 0
        %536 = vmatpush2.bf16.msra.mxu0 0
        %537 = vmatprep.subr.bf16.mxu0 0
        %538 = vmatpush2.bf16.msra.mxu0 0
        %539 = vmatprep.subr.bf16.mxu0 0
        %540 = vmatpush2.bf16.msra.mxu0 0
        %541 = vmatprep.subr.bf16.mxu0 0
        %542 = vmatpush2.bf16.msra.mxu0 0
        %543 = vmatprep.subr.bf16.mxu0 0
        %544 = vmatpush2.bf16.msra.mxu0 0
        %545 = vmatprep.subr.bf16.mxu0 0
        %546 = vmatpush2.bf16.msra.mxu0 0
        %547 = vmatprep.subr.bf16.mxu0 0
        %548 = vmatpush2.bf16.msra.mxu0 0
        %549 = vmatprep.mubr.bf16.mxu0 0
        %550 = vmatmul.mubr.bf16.gmra.mxu0 %v512
        %v551 = vpop.f32.mrf.mxu0
        %v552 = vadd.f32 %v486, %v551
        %v553 = vpop.f32.mrf.mxu0
        %v554 = vpop.f32.mrf.mxu0
        %v555 = vadd.f32 %v490, %v554
        %v556 = vpop.f32.mrf.mxu0
        %557 = vmatprep.mubr.bf16.mxu0 0
        %558 = vmatmul.mubr.bf16.gmra.mxu0 %v515
        %v559 = vpop.f32.mrf.mxu0
        %v560 = vadd.f32 %v494, %v559
        %v561 = vpop.f32.mrf.mxu0
        %v562 = vpop.f32.mrf.mxu0
        %v563 = vadd.f32 %v498, %v562
        %v564 = vpop.f32.mrf.mxu0
        %565 = vdwg.mxu0
        %v566 = vadd.f32 %v552, %v555
        %v567 = vadd.f32 %v566, %v560
        %v568 = vadd.f32 %v567, %v563
        %v569 = vrot.slane %v568, 4
        %v570 = vadd.f32 %v568, %v569
        %v571 = vrot.slane %v570, 2
        %v572 = vadd.f32 %v570, %v571
        %v573 = vrot.slane %v572, 1
        %v574 = vadd.f32 %v572, %v573
        %v575 = vmul.f32 %v574, %v408
        %v576 = vsub.f32 %v552, %v575
        %v577 = vsub.f32 %v555, %v575
        %v578 = vsub.f32 %v560, %v575
        %v579 = vsub.f32 %v563, %v575
        %v580 = vmul.f32 %v576, %v576
        %v581 = vmul.f32 %v577, %v577
        %v582 = vmul.f32 %v578, %v578
        %v583 = vmul.f32 %v579, %v579
        %v584 = vadd.f32 %v580, %v581
        %v585 = vadd.f32 %v584, %v582
        %v586 = vadd.f32 %v585, %v583
        %v587 = vrot.slane %v586, 4
        %v588 = vadd.f32 %v586, %v587
        %v589 = vrot.slane %v588, 2
        %v590 = vadd.f32 %v588, %v589
        %v591 = vrot.slane %v590, 1
        %v592 = vadd.f32 %v590, %v591
        %v593 = vmul.f32 %v592, %v408
        %v594 = vadd.f32 %v593, 1e-05
        %v595 = vrsqrt.pop %v594
        %v596 = vmul.f32 %v576, %v595
        %v597 = vmul.f32 %v577, %v595
        %v598 = vmul.f32 %v578, %v595
        %v599 = vmul.f32 %v579, %v595
        %600 = vset.pattern.permute.xlu0 6
        %601 = vperm.xlu0 %600, %v278
        %v602 = vpop.permute.xlu0 %601
        %604 = vset.pattern.permute.xlu0 6
        %605 = vperm.xlu0 %604, %v279
        %v606 = vpop.permute.xlu0 %605
        %608 = vset.pattern.permute.xlu0 6
        %609 = vperm.xlu0 %608, %v280
        %v610 = vpop.permute.xlu0 %609
        %612 = vset.pattern.permute.xlu0 6
        %613 = vperm.xlu0 %612, %v281
        %v614 = vpop.permute.xlu0 %613
        %v616 = vmul.f32 %v596, %v602
        %v617 = vmul.f32 %v597, %v606
        %v618 = vmul.f32 %v598, %v610
        %v619 = vmul.f32 %v599, %v614
        %620 = vset.pattern.permute.xlu0 7
        %621 = vperm.xlu0 %620, %v278
        %v622 = vpop.permute.xlu0 %621
        %624 = vset.pattern.permute.xlu0 7
        %625 = vperm.xlu0 %624, %v279
        %v626 = vpop.permute.xlu0 %625
        %628 = vset.pattern.permute.xlu0 7
        %629 = vperm.xlu0 %628, %v280
        %v630 = vpop.permute.xlu0 %629
        %632 = vset.pattern.permute.xlu0 7
        %633 = vperm.xlu0 %632, %v281
        %v634 = vpop.permute.xlu0 %633
        %v636 = vadd.f32 %v616, %v622
        %v637 = vadd.f32 %v617, %v626
        %v638 = vadd.f32 %v618, %v630
        %v639 = vadd.f32 %v619, %v634
        %v640 = vmax.f32 %v636, 0.0
        %v641 = vmax.f32 %v637, 0.0
        %v642 = vmax.f32 %v638, 0.0
        %v643 = vmax.f32 %v639, 0.0
        %v644 = vld [vmem:[%s4] sm:$0xf]
        %v645 = vpack.c.bf16 %v641, %v640
        %v646 = vpack.c.bf16 %v643, %v642
        %647 = vset.pattern.permute.xlu0 8
        %648 = vperm.xlu0 %647, %v278
        %v649 = vpop.permute.xlu0 %648
        %v652 = vsel %vm510, %v644, 0
        %654 = vmatprep.subr.bf16.mxu0 0
        %655 = vmatpush1.bf16.msra.mxu0 0
        %656 = vmatprep.subr.bf16.mxu0 0
        %657 = vmatpush1.bf16.msra.mxu0 0
        %658 = vmatprep.subr.bf16.mxu0 0
        %659 = vmatpush1.bf16.msra.mxu0 0
        %660 = vmatprep.subr.bf16.mxu0 0
        %661 = vmatpush1.bf16.msra.mxu0 0
        %662 = vmatprep.subr.bf16.mxu0 0
        %663 = vmatpush1.bf16.msra.mxu0 0
        %664 = vmatprep.subr.bf16.mxu0 0
        %665 = vmatpush1.bf16.msra.mxu0 0
        %666 = vmatprep.subr.bf16.mxu0 0
        %667 = vmatpush1.bf16.msra.mxu0 %v646
        %668 = vmatprep.subr.bf16.mxu0 0
        %669 = vmatpush1.bf16.msra.mxu0 %v645
        %670 = vmatprep.subr.bf16.mxu0 0
        %671 = vmatpush2.bf16.msra.mxu0 0
        %672 = vmatprep.subr.bf16.mxu0 0
        %673 = vmatpush2.bf16.msra.mxu0 0
        %674 = vmatprep.subr.bf16.mxu0 0
        %675 = vmatpush2.bf16.msra.mxu0 0
        %676 = vmatprep.subr.bf16.mxu0 0
        %677 = vmatpush2.bf16.msra.mxu0 0
        %678 = vmatprep.subr.bf16.mxu0 0
        %679 = vmatpush2.bf16.msra.mxu0 0
        %680 = vmatprep.subr.bf16.mxu0 0
        %681 = vmatpush2.bf16.msra.mxu0 0
        %682 = vmatprep.subr.bf16.mxu0 0
        %683 = vmatpush2.bf16.msra.mxu0 0
        %684 = vmatprep.subr.bf16.mxu0 0
        %685 = vmatpush2.bf16.msra.mxu0 0
        %686 = vmatprep.mubr.bf16.mxu0 0
        %687 = vmatmul.mubr.bf16.gmra.mxu0 %v652
        %v688 = vpop.f32.mrf.mxu0
        %v689 = vadd.f32 %v649, %v688
        %v690 = vpop.f32.mrf.mxu0
        %v691 = vpop.f32.mrf.mxu0
        %v692 = vpop.f32.mrf.mxu0
        %693 = vdwg.mxu0
        %v694 = vtanh.pop %v689
        %695 = vst [vmem:[%s276] sm:$0xff] %v694
        %s696 = sand.u32 %s138, 1
        %s697 = scalar_lea.sflag [#allocation5], %s696
        %s698 = sand.u32 %s138, 1
        %s699 = smul.addr %s698, 8
        %s700 = scalar_lea.vmem [#allocation6], %s699
        // Predicated region
        $region83: #{tpu_custom_call.1} parent=73 // pred_check
          %p701 = pneg %p148
        $region84: #{tpu_custom_call.1} parent=73 // pred_check_branch
          %703 = sbr.rel (%p701) target = $region86
        $region85: #{tpu_custom_call.1} parent=73 // pred_region
          %s705 = ssub.s32 128, 128
          %706 = vsyncadd %s697, %s705
          %s707 = smul.addr %s20, 128
          %s708 = scalar_lea.hbm %s5, %s707
          %s710 = sshll.u32 %s700, 4
          %s711 = int_to_ptr.vmem [resolvable:$true] %s710
          %713 = dma.vmem_to_hbm [thread:$0]  %s711, 128, %s708, %s697
        $region86: #{tpu_custom_call.1} parent=73 // pred_fallthru
          _
      $region74: #{tpu_custom_call.1} parent=5 // pred_fallthru
        _
      %p714 = scmp.le.s32.totalorder 2, %s15
      // Predicated region
      $region87: #{tpu_custom_call.1} parent=5 // pred_check
        %p715 = pneg %p714
      $region88: #{tpu_custom_call.1} parent=5 // pred_check_branch
        %717 = sbr.rel (%p715) target = $region90
      $region89: #{tpu_custom_call.1} parent=5 // pred_region
        %s718 = ssub.s32 %s15, 2
        // Predicated region
        $region91: #{tpu_custom_call.1} parent=89 // pred_check
          %p719 = pneg %p154
        $region92: #{tpu_custom_call.1} parent=89 // pred_check_branch
          %721 = sbr.rel (%p719) target = $region94
        $region93: #{tpu_custom_call.1} parent=89 // pred_region
          %s722 = sand.u32 %s139, 1
          %s723 = scalar_lea.sflag [#allocation5], %s722
          %s724 = sand.u32 %s139, 1
          %s725 = smul.addr %s724, 8
          %s726 = scalar_lea.vmem [#allocation6], %s725
          %727 = dma.done %s723, 128
        $region94: #{tpu_custom_call.1} parent=89 // pred_fallthru
          _
      $region90: #{tpu_custom_call.1} parent=5 // pred_fallthru
        _
    $region6: #{tpu_custom_call.1} parent=1 // loop_footer
      %s19 = sadd.s32 1, %s15
    $region7: #{tpu_custom_call.1} parent=1 // loop_footer_branch
      %14 = sbr.rel target = $region3
    $region8: #{tpu_custom_call.1} parent=1 // loop_exit
      _
    %728 = vsyncpa [#allocation4], 1
    %s729 = scalar_lea.sflag [#allocation4], 1
    %730 = vsyncpa %s729, 1
    %731 = vsyncpa [#allocation5], 1
    %s732 = scalar_lea.sflag [#allocation5], 1
    %733 = vsyncpa %s732, 1

</llo_original>
